<compile_context>
chip_gen: v7x
topology: tpu7x:2x2x1
jax: 0.10.0
libtpu: 0.0.40
codegen_flags: <defaults>
</compile_context>

<pallas_src>
import jax
import jax.numpy as jnp
from jax.experimental import pallas as pl
from jax.experimental.pallas import tpu as pltpu


def _bow_decoder_kernel(xm_ref, w_ref, b_ref, o_ref):
    """xm: (Bp, T) bf16, VMEM-resident; w: (T, TN) bf16 streamed tile;
    b: (1, TN) f32; o: (Bp, TN) out dtype."""
    y = jnp.dot(xm_ref[...], w_ref[...], preferred_element_type=jnp.float32)
    o_ref[...] = (y + b_ref[...].astype(jnp.float32)).astype(o_ref.dtype)


def _default_tile_n():
    """Architecture-aware vocab tile (amortize ~0.35us/step against HBM BW)."""
    try:
        kind = jax.devices()[0].device_kind.lower()
    except Exception:
        return 8192
    if "v5" in kind:
        return 4096
    if "v6" in kind:
        return 8192
    if "v7" in kind or "7x" in kind:
        return 16384
    return 8192


def _choose_tile_n(V, requested):
    """Pick a lane-dense (128-multiple) vocab tile; keep >= 2 tiles if possible."""
    v128 = ((V + 127) // 128) * 128
    tn = requested if requested is not None else _default_tile_n()
    tn = max(128, min(int(tn), v128))
    tn = (tn // 128) * 128
    # Guarantee >= 2 vocab tiles when V allows it so (a) the BlockSpec pipeline
    # actually overlaps DMA/compute and (b) v7x's two TensorCores both stream W.
    if v128 > 128 and pl.cdiv(v128, tn) < 2:
        tn = 128 * pl.cdiv(v128 // 128, 2)
    return tn


def bow_decoder_forward(x, w_t, bias, *, dropout=0.2, training=False,
                        rng_key=None, tile_n=None, out_dtype=None):
    """x: [B, T] f32; w_t: [T, V] (Linear weight transposed, bf16 or f32);
    bias: [V] f32.  Returns [B, V] in `out_dtype` (default: x.dtype)."""
    B, T = x.shape
    T2, V = w_t.shape
    assert T == T2
    assert bias.shape == (V,)
    out_dtype = x.dtype if out_dtype is None else out_dtype

    # Inverted dropout, folded into x host-side (x is tiny: [B, T]).
    if training and dropout > 0.0:
        if rng_key is None:
            raise ValueError(
                "training=True with dropout>0 requires an explicit rng_key")
        keep = jax.random.bernoulli(rng_key, 1.0 - dropout, (B, T))
        x = x * keep.astype(x.dtype) * (1.0 / (1.0 - dropout))

    # Pre-cast activations to the weight dtype: the kernel then does a single
    # bf16 MXU matmul per tile with no per-tile VPU multiply/cast.
    xm = x.astype(w_t.dtype)

    # Pad batch to a sublane multiple (block must be full-extent or 8-aligned).
    Bp = ((B + 7) // 8) * 8
    if Bp != B:
        xm = jnp.pad(xm, ((0, Bp - B), (0, 0)))

    # Lane-dense vocab tiling: pad V (W columns + bias) to a multiple of the
    # tile so every grid step is a full, unmasked, double-buffered tile.
    # (For production, pre-pad the weights once outside the step function.)
    tn = _choose_tile_n(V, tile_n)
    Vp = pl.cdiv(V, tn) * tn
    if Vp != V:
        w_t = jnp.pad(w_t, ((0, 0), (0, Vp - V)))
        bias = jnp.pad(bias, (0, Vp - V))
    grid_n = Vp // tn
    bias2d = bias.reshape(1, Vp).astype(jnp.float32)

    out = pl.pallas_call(
        _bow_decoder_kernel,
        out_shape=jax.ShapeDtypeStruct((Bp, Vp), out_dtype),
        grid_spec=pltpu.PrefetchScalarGridSpec(
            num_scalar_prefetch=0,
            grid=(grid_n,),
            in_specs=[
                pl.BlockSpec((Bp, T), lambda j: (0, 0)),      # x (VMEM-resident)
                pl.BlockSpec((T, tn), lambda j: (0, j)),      # W tile (streamed)
                pl.BlockSpec((1, tn), lambda j: (0, j)),      # bias tile
            ],
            out_specs=pl.BlockSpec((Bp, tn), lambda j: (0, j)),
        ),
        compiler_params=pltpu.CompilerParams(
            dimension_semantics=("parallel",)),
    )(xm, w_t, bias2d)

    if Bp != B or Vp != V:
        out = out[:B, :V]
    return out


def init_bow_decoder_params(key, num_topics, output_dim, *,
                            weight_dtype=jnp.bfloat16):
    """nn.Linear-style init: U(-1/sqrt(fan_in), 1/sqrt(fan_in)).

    Weight is kept pre-transposed as [num_topics, output_dim] and stored in
    bf16 (halves HBM traffic for this bandwidth-bound kernel); bias stays f32.
    """
    kw, kb = jax.random.split(key)
    bound = 1.0 / jnp.sqrt(float(num_topics))
    w_t = jax.random.uniform(kw, (num_topics, output_dim),
                             minval=-bound, maxval=bound,
                             dtype=jnp.float32).astype(weight_dtype)
    b = jax.random.uniform(kb, (output_dim,),
                           minval=-bound, maxval=bound, dtype=jnp.float32)
    return w_t, b


if __name__ == "__main__":
    key = jax.random.PRNGKey(0)
    k_x, k_p, k_d = jax.random.split(key, 3)

    batch_size = 8
    num_topics = 32       # hidden topic dim
    output_dim = 1024     # vocab size (BoW dim) -> auto tile 512, grid of 2
    dropout = 0.2

    qt_max = jax.random.uniform(k_x, (batch_size, num_topics), dtype=jnp.float32)
    w_t, bias = init_bow_decoder_params(k_p, num_topics, output_dim)
    w_f32 = w_t.astype(jnp.float32)

    # Eval-mode forward (dropout = identity), matching module.eval() semantics.
    out = jax.block_until_ready(
        bow_decoder_forward(qt_max, w_t, bias, dropout=dropout, training=False))
    assert out.shape == (batch_size, output_dim)
    ref = qt_max.astype(jnp.bfloat16).astype(jnp.float32) @ w_f32 + bias
    assert jnp.allclose(out, ref, atol=1e-4, rtol=1e-4), \
        float(jnp.max(jnp.abs(out - ref)))

    # Training path (dropout active; explicit key required) + reference check.
    out_train = jax.block_until_ready(
        bow_decoder_forward(qt_max, w_t, bias, dropout=dropout,
                            training=True, rng_key=k_d))
    assert out_train.shape == (batch_size, output_dim)
    keep = jax.random.bernoulli(k_d, 1.0 - dropout, qt_max.shape)
    x_drop = qt_max * keep.astype(jnp.float32) * (1.0 / (1.0 - dropout))
    ref_train = x_drop.astype(jnp.bfloat16).astype(jnp.float32) @ w_f32 + bias
    assert jnp.allclose(out_train, ref_train, atol=1e-4, rtol=1e-4), \
        float(jnp.max(jnp.abs(out_train - ref_train)))

    # Non-128-aligned vocab (exercises the V-padding path) with the optional
    # bf16 output mode (lower HBM traffic for a downstream log-softmax).
    V2 = 1000
    w2, b2 = init_bow_decoder_params(k_p, num_topics, V2)
    out2 = jax.block_until_ready(
        bow_decoder_forward(qt_max, w2, b2, training=False,
                            out_dtype=jnp.bfloat16))
    assert out2.shape == (batch_size, V2)
    ref2 = (qt_max.astype(jnp.bfloat16).astype(jnp.float32)
            @ w2.astype(jnp.float32) + b2)
    assert jnp.allclose(out2.astype(jnp.float32), ref2, atol=5e-2, rtol=5e-2), \
        float(jnp.max(jnp.abs(out2.astype(jnp.float32) - ref2)))

    print("KERNEL_OK")
</pallas_src>

<mosaic_0001>
module attributes {stable_mosaic.version = 11 : i64} {
  func.func @_bow_decoder_kernel(%arg0: i32, %arg1: memref<8x32xbf16, #tpu.memory_space<vmem>>, %arg2: memref<32x512xbf16, #tpu.memory_space<vmem>>, %arg3: memref<1x512xf32, #tpu.memory_space<vmem>>, %arg4: memref<8x512xf32, #tpu.memory_space<vmem>>) attributes {dimension_semantics = [#tpu.dimension_semantics<parallel>], iteration_bounds = array<i64: 2>, scalar_prefetch = 0 : i64, scratch_operands = 0 : i64, tpu.core_type = #tpu.core_type<tc>, window_params = [{pipeline_mode = #tpu.pipeline_mode<synchronous>, transform_indices = @transform_0, window_bounds = array<i64: 8, 32>}, {transform_indices = @transform_1, window_bounds = array<i64: 32, 512>}, {transform_indices = @transform_2, window_bounds = array<i64: 1, 512>}, {transform_indices = @transform_3, window_bounds = array<i64: 8, 512>}]} {
    %c0 = arith.constant 0 : index
    %c0_0 = arith.constant 0 : index
    %0 = vector.load %arg1[%c0, %c0_0] : memref<8x32xbf16, #tpu.memory_space<vmem>>, vector<8x32xbf16>
    %c0_1 = arith.constant 0 : index
    %c0_2 = arith.constant 0 : index
    %1 = vector.load %arg2[%c0_1, %c0_2] : memref<32x512xbf16, #tpu.memory_space<vmem>>, vector<32x512xbf16>
    %cst = arith.constant dense<0.000000e+00> : vector<8x512xf32>
    %2 = tpu.matmul %0, %1, %cst {dimension_numbers = #tpu.dot_dimension_numbers<[1], [0], [0], [1], [0, 0, 1, 1], [], []>} : vector<8x32xbf16>, vector<32x512xbf16>, vector<8x512xf32> -> vector<8x512xf32>
    %c0_3 = arith.constant 0 : index
    %c0_4 = arith.constant 0 : index
    %3 = vector.load %arg3[%c0_3, %c0_4] : memref<1x512xf32, #tpu.memory_space<vmem>>, vector<1x512xf32>
    %4 = vector.broadcast %3 : vector<1x512xf32> to vector<8x512xf32>
    %5 = arith.addf %2, %4 : vector<8x512xf32>
    %c0_5 = arith.constant 0 : index
    %c0_6 = arith.constant 0 : index
    %6 = vector.load %arg4[%c0_5, %c0_6] : memref<8x512xf32, #tpu.memory_space<vmem>>, vector<8x512xf32>
    tpu.vector_store %arg4[%c0_5, %c0_6], %5 {strides = array<i32>} : memref<8x512xf32, #tpu.memory_space<vmem>>, vector<8x512xf32>,
    return
  }
  func.func @transform_0(%arg0: i32) -> (i32, i32) {
    %c0_i32 = arith.constant 0 : i32
    %c0_i32_0 = arith.constant 0 : i32
    %c0_i32_1 = arith.constant 0 : i32
    return %c0_i32, %c0_i32_0 : i32, i32
  }
  func.func @transform_1(%arg0: i32) -> (i32, i32) {
    %c0_i32 = arith.constant 0 : i32
    %c0_i32_0 = arith.constant 0 : i32
    return %c0_i32, %arg0 : i32, i32
  }
  func.func @transform_2(%arg0: i32) -> (i32, i32) {
    %c0_i32 = arith.constant 0 : i32
    %c0_i32_0 = arith.constant 0 : i32
    return %c0_i32, %arg0 : i32, i32
  }
  func.func @transform_3(%arg0: i32) -> (i32, i32) {
    %c0_i32 = arith.constant 0 : i32
    %c0_i32_0 = arith.constant 0 : i32
    return %c0_i32, %arg0 : i32, i32
  }
}

</mosaic_0001>

<llo_original>
// kernel: tpu_custom_call.1
$region0: #{tpu_custom_call.1}
  #allocation0 [shape = 'u32[]', space=smem, size = 0x4, offset = 0x4, fixed_abs, tag = 'smem constant byte address 0x4 - core index']
  #allocation1 [shape = 'u32[144,128]{1,0:T(1,128)}', space=vmem, size = 0x12000, scoped, tag = 'internal scratch']
  %s0 = inlined_call_operand.hbm [shape: bf16[8,32], index: 0, kind: input, shape index: {}]
  %s1 = inlined_call_operand.hbm [shape: bf16[32,1024], index: 1, kind: input, shape index: {}]
  %s2 = inlined_call_operand.hbm [shape: f32[1,1024], index: 2, kind: input, shape index: {}]
  %s3 = inlined_call_operand.hbm [shape: f32[8,1024], index: 3, kind: output, shape index: {}]
  %s4 = sld [smem:[#allocation0]]
  $region57: #{tpu_custom_call.1} parent=0
    _
  %s6 = ssub.s32 1, %s4
  %s7 = scalar_select 0, %s6, %s4
  $region1: #{tpu_custom_call.1} parent=0
    #allocation2 [shape = 'u8[2048]{0}', space=vmem, size = 0x800, scoped, tag = 'input window, operand 0, single buffered']
    #allocation3 [shape = 's32[2]{0}', space=sflag, size = 0x8, scoped, tag = 'scoped memory for tpu_custom_call.1']
    #allocation4 [shape = 's32[2]{0}', space=sflag, size = 0x8, scoped, tag = 'scoped memory for tpu_custom_call.1']
    #allocation5 [shape = 'u8[65536]{0}', space=vmem, size = 0x10000, scoped, tag = 'input window, operand 1']
    #allocation6 [shape = 's32[2]{0}', space=sflag, size = 0x8, scoped, tag = 'scoped memory for tpu_custom_call.1']
    #allocation7 [shape = 'u8[4096]{0}', space=vmem, size = 0x1000, scoped, tag = 'input window, operand 2']
    #allocation8 [shape = 'u8[32768]{0}', space=vmem, size = 0x8000, scoped, tag = 'output window, operand 0']
    %8 = vsyncpa [#allocation3], 0
    %9 = vsyncpa [#allocation6], 0
    %s10 = scalar_lea.sflag [#allocation6], 1
    %11 = vsyncpa %s10, 0
    %12 = vsyncpa [#allocation4], 0
    %s13 = scalar_lea.sflag [#allocation4], 1
    %14 = vsyncpa %s13, 0
    loop: start=0, step=1, limit=4
    $region2: #{tpu_custom_call.1} parent=1 // loop_pre_header
      _
    $region3: #{tpu_custom_call.1} parent=1 // loop_header
      %s16 = sphi 0, %s20
      %p17 = scmp.ge.s32.totalorder %s16, 4
      %s24 = sphi 0, %s24
      %s26 = sphi 0, %s24
      %s27 = sphi 0, %s26
      %s41 = sphi 0, %s27
      %s47 = sphi 0, %s49
      %s50 = sphi 0, %s47
      %s51 = sphi 0, %s50
      %s67 = sphi 0, %s51
      %s73 = sphi 0, %s75
      %s76 = sphi 0, %s73
      %s77 = sphi 0, %s76
      %s93 = sphi 0, %s77
      %s99 = sphi 0, %s101
      %s102 = sphi 0, %s99
      %s103 = sphi 0, %s102
      %s119 = sphi 0, %s103
    $region4: #{tpu_custom_call.1} parent=1 // loop_header_branch
      %19 = sbr.rel (%p17) target = $region8
    $region5: #{tpu_custom_call.1} parent=1 // loop_body
      %s21 = ssub.s32 %s16, 1
      %s22 = ssub.s32 %s16, 2
      %s23 = sadd.s32 %s16, 1
      %s25 = sadd.s32 %s24, 1
      %p28 = scmp.eq.s32.totalorder %s16, 1
      %p29 = scmp.ne.s32.totalorder %s24, %s26
      %p30 = scmp.eq.s32.totalorder %s16, 0
      %p31 = por %p29, %p30
      %p32 = scmp.ne.s32.totalorder %s24, %s26
      %p33 = scmp.eq.s32.totalorder %s21, 1
      %p34 = por %p32, %p33
      %p35 = scmp.ne.s32.totalorder %s26, %s27
      %p36 = scmp.eq.s32.totalorder %s21, 0
      %p37 = por %p35, %p36
      %p38 = scmp.ne.s32.totalorder %s26, %s27
      %p39 = scmp.eq.s32.totalorder %s22, 1
      %p40 = por %p38, %p39
      %p42 = scmp.ne.s32.totalorder %s27, %s41
      %p43 = scmp.eq.s32.totalorder %s22, 0
      %p44 = por %p42, %p43
      %s45 = ssub.s32 %s16, %s23
      %p46 = scmp.eq.s32.totalorder %s45, 0
      %s48 = sadd.s32 %s47, 1
      %s49 = scalar_select %p46, %s47, %s48
      %p52 = pneg %p46
      %p53 = scmp.eq.s32.totalorder %s16, 1
      %p54 = por %p52, %p53
      %p55 = scmp.ne.s32.totalorder %s47, %s50
      %p56 = scmp.eq.s32.totalorder %s16, 0
      %p57 = por %p55, %p56
      %p58 = scmp.ne.s32.totalorder %s47, %s50
      %p59 = scmp.eq.s32.totalorder %s21, 1
      %p60 = por %p58, %p59
      %p61 = scmp.ne.s32.totalorder %s50, %s51
      %p62 = scmp.eq.s32.totalorder %s21, 0
      %p63 = por %p61, %p62
      %p64 = scmp.ne.s32.totalorder %s50, %s51
      %p65 = scmp.eq.s32.totalorder %s22, 1
      %p66 = por %p64, %p65
      %p68 = scmp.ne.s32.totalorder %s51, %s67
      %p69 = scmp.eq.s32.totalorder %s22, 0
      %p70 = por %p68, %p69
      %s71 = ssub.s32 %s16, %s23
      %p72 = scmp.eq.s32.totalorder %s71, 0
      %s74 = sadd.s32 %s73, 1
      %s75 = scalar_select %p72, %s73, %s74
      %p78 = pneg %p72
      %p79 = scmp.eq.s32.totalorder %s16, 1
      %p80 = por %p78, %p79
      %p81 = scmp.ne.s32.totalorder %s73, %s76
      %p82 = scmp.eq.s32.totalorder %s16, 0
      %p83 = por %p81, %p82
      %p84 = scmp.ne.s32.totalorder %s73, %s76
      %p85 = scmp.eq.s32.totalorder %s21, 1
      %p86 = por %p84, %p85
      %p87 = scmp.ne.s32.totalorder %s76, %s77
      %p88 = scmp.eq.s32.totalorder %s21, 0
      %p89 = por %p87, %p88
      %p90 = scmp.ne.s32.totalorder %s76, %s77
      %p91 = scmp.eq.s32.totalorder %s22, 1
      %p92 = por %p90, %p91
      %p94 = scmp.ne.s32.totalorder %s77, %s93
      %p95 = scmp.eq.s32.totalorder %s22, 0
      %p96 = por %p94, %p95
      %s97 = ssub.s32 %s16, %s23
      %p98 = scmp.eq.s32.totalorder %s97, 0
      %s100 = sadd.s32 %s99, 1
      %s101 = scalar_select %p98, %s99, %s100
      %p104 = pneg %p98
      %p105 = scmp.eq.s32.totalorder %s16, 1
      %p106 = por %p104, %p105
      %p107 = scmp.ne.s32.totalorder %s99, %s102
      %p108 = scmp.eq.s32.totalorder %s16, 0
      %p109 = por %p107, %p108
      %p110 = scmp.ne.s32.totalorder %s99, %s102
      %p111 = scmp.eq.s32.totalorder %s21, 1
      %p112 = por %p110, %p111
      %p113 = scmp.ne.s32.totalorder %s102, %s103
      %p114 = scmp.eq.s32.totalorder %s21, 0
      %p115 = por %p113, %p114
      %p116 = scmp.ne.s32.totalorder %s102, %s103
      %p117 = scmp.eq.s32.totalorder %s22, 1
      %p118 = por %p116, %p117
      %p120 = scmp.ne.s32.totalorder %s103, %s119
      %p121 = scmp.eq.s32.totalorder %s22, 0
      %p122 = por %p120, %p121
      %p123 = scmp.le.s32.totalorder 1, %s16
      %p124 = scmp.lt.s32.totalorder %s16, 3
      %p125 = pnand %p123, %p124
      %p126 = pneg %p125
      // Predicated region
      $region9: #{tpu_custom_call.1} parent=5 // pred_check
        _
      $region10: #{tpu_custom_call.1} parent=5 // pred_check_branch
        %128 = sbr.rel (%p125) target = $region12
      $region11: #{tpu_custom_call.1} parent=5 // pred_region
        %s129 = ssub.s32 %s16, 1
        // Predicated region
        $region13: #{tpu_custom_call.1} parent=11 // pred_check
          %p130 = pneg %p37
        $region14: #{tpu_custom_call.1} parent=11 // pred_check_branch
          %132 = sbr.rel (%p130) target = $region16
        $region15: #{tpu_custom_call.1} parent=11 // pred_region
          %s134 = ssub.s32 64, 64
          %135 = vsyncadd [#allocation3], %s134
          %s137 = sshll.u32 [#allocation2], 4
          %s138 = int_to_ptr.vmem [resolvable:$true] %s137
          %140 = dma.hbm_to_vmem [thread:$0]  %s0, 64, %s138, [#allocation3]
        $region16: #{tpu_custom_call.1} parent=11 // pred_fallthru
          _
      $region12: #{tpu_custom_call.1} parent=5 // pred_fallthru
        _
      %p141 = scmp.lt.s32.totalorder %s16, 2
      // Predicated region
      $region17: #{tpu_custom_call.1} parent=5 // pred_check
        %p142 = pneg %p141
      $region18: #{tpu_custom_call.1} parent=5 // pred_check_branch
        %144 = sbr.rel (%p142) target = $region20
      $region19: #{tpu_custom_call.1} parent=5 // pred_region
        // Predicated region
        $region21: #{tpu_custom_call.1} parent=19 // pred_check
          %p145 = pneg %p57
        $region22: #{tpu_custom_call.1} parent=19 // pred_check_branch
          %147 = sbr.rel (%p145) target = $region24
        $region23: #{tpu_custom_call.1} parent=19 // pred_region
          %s148 = sand.u32 %s16, 1
          %s149 = scalar_lea.sflag [#allocation6], %s148
          %s150 = sand.u32 %s47, 1
          %s151 = smul.addr %s150, 64
          %s152 = scalar_lea.vmem [#allocation5], %s151
          %s153 = smul.u32 4, %s16
          %s155 = ssub.s32 1024, 1024
          %156 = vsyncadd %s149, %s155
          %s157 = smul.addr %s153, 64
          %s158 = scalar_lea.hbm %s1, %s157
          %s159 = sshll.u32 %s152, 4
          %s160 = int_to_ptr.vmem [resolvable:$true] %s159
          %165 = dma.hbm_to_vmem [thread:$0]  %s158, 1024, %s160, %s149, 512, 256, 16
        $region24: #{tpu_custom_call.1} parent=19 // pred_fallthru
          _
        // Predicated region
        $region25: #{tpu_custom_call.1} parent=19 // pred_check
          %p166 = pneg %p83
        $region26: #{tpu_custom_call.1} parent=19 // pred_check_branch
          %168 = sbr.rel (%p166) target = $region28
        $region27: #{tpu_custom_call.1} parent=19 // pred_region
          %s169 = sand.u32 %s16, 1
          %s170 = scalar_lea.sflag [#allocation6], %s169
          %s171 = sand.u32 %s73, 1
          %s172 = smul.addr %s171, 4
          %s173 = scalar_lea.vmem [#allocation7], %s172
          %s174 = smul.u32 4, %s16
          %s176 = ssub.s32 64, 64
          %177 = vsyncadd %s170, %s176
          %s178 = smul.addr %s174, 16
          %s179 = scalar_lea.hbm %s2, %s178
          %s181 = sshll.u32 %s173, 4
          %s182 = int_to_ptr.vmem [resolvable:$true] %s181
          %184 = dma.hbm_to_vmem [thread:$0]  %s179, 64, %s182, %s170
        $region28: #{tpu_custom_call.1} parent=19 // pred_fallthru
          _
      $region20: #{tpu_custom_call.1} parent=5 // pred_fallthru
        _
      %p185 = scmp.le.s32.totalorder 1, %s16
      %p186 = scmp.lt.s32.totalorder %s16, 3
      %p187 = pnand %p185, %p186
      %p188 = pneg %p187
      // Predicated region
      $region29: #{tpu_custom_call.1} parent=5 // pred_check
        _
      $region30: #{tpu_custom_call.1} parent=5 // pred_check_branch
        %190 = sbr.rel (%p187) target = $region32
      $region31: #{tpu_custom_call.1} parent=5 // pred_region
        %s191 = ssub.s32 %s16, 1
        // Predicated region
        $region33: #{tpu_custom_call.1} parent=31 // pred_check
          %p192 = pneg %p37
        $region34: #{tpu_custom_call.1} parent=31 // pred_check_branch
          %194 = sbr.rel (%p192) target = $region36
        $region35: #{tpu_custom_call.1} parent=31 // pred_region
          %195 = dma.done [#allocation3], 64
        $region36: #{tpu_custom_call.1} parent=31 // pred_fallthru
          _
        %s196 = sand.u32 %s21, 1
        %s197 = scalar_lea.sflag [#allocation6], %s196
        %s198 = sand.u32 %s50, 1
        %s199 = smul.addr %s198, 64
        %s200 = scalar_lea.vmem [#allocation5], %s199
        // Predicated region
        $region37: #{tpu_custom_call.1} parent=31 // pred_check
          %p201 = pneg %p63
        $region38: #{tpu_custom_call.1} parent=31 // pred_check_branch
          %203 = sbr.rel (%p201) target = $region40
        $region39: #{tpu_custom_call.1} parent=31 // pred_region
          %204 = dma.done %s197, 1024
        $region40: #{tpu_custom_call.1} parent=31 // pred_fallthru
          _
        %s205 = sand.u32 %s21, 1
        %s206 = scalar_lea.sflag [#allocation6], %s205
        %s207 = sand.u32 %s76, 1
        %s208 = smul.addr %s207, 4
        %s209 = scalar_lea.vmem [#allocation7], %s208
        // Predicated region
        $region41: #{tpu_custom_call.1} parent=31 // pred_check
          %p210 = pneg %p89
        $region42: #{tpu_custom_call.1} parent=31 // pred_check_branch
          %212 = sbr.rel (%p210) target = $region44
        $region43: #{tpu_custom_call.1} parent=31 // pred_region
          %213 = dma.done %s206, 64
        $region44: #{tpu_custom_call.1} parent=31 // pred_fallthru
          _
        %p214 = pneg %p37
        %p215 = pneg %p34
        %s216 = sand.u32 %s21, 1
        %s217 = scalar_lea.sflag [#allocation6], %s216
        %s218 = sand.u32 %s50, 1
        %s219 = smul.addr %s218, 64
        %s220 = scalar_lea.vmem [#allocation5], %s219
        %p221 = pneg %p63
        %p222 = pneg %p60
        %s223 = sand.u32 %s21, 1
        %s224 = scalar_lea.sflag [#allocation6], %s223
        %s225 = sand.u32 %s76, 1
        %s226 = smul.addr %s225, 4
        %s227 = scalar_lea.vmem [#allocation7], %s226
        %p228 = pneg %p89
        %p229 = pneg %p86
        %p230 = pneg %p115
        %p231 = pneg %p112
        %s232 = sand.u32 %s102, 1
        %s233 = scalar_lea.sflag [#allocation4], %s232
        %s234 = sand.u32 %s102, 1
        %s235 = smul.addr %s234, 32
        %s236 = scalar_lea.vmem [#allocation8], %s235
        %s237 = smul.u32 4, %s21
        %s238 = smul.u32 4, %s21
        %s239 = smul.u32 4, %s21
        %v241 = vld [vmem:[#allocation2] sm:$0xf]
        %v242 = vld [vmem:[%s200] sm:$0xff]
        %v243 = vld [vmem:[%s200 + $0x8] sm:$0xff]
        %v244 = vld [vmem:[%s200 + $0x10] sm:$0xff]
        %v245 = vld [vmem:[%s200 + $0x18] sm:$0xff]
        %v246 = vld [vmem:[%s200 + $0x20] sm:$0xff]
        %v247 = vld [vmem:[%s200 + $0x28] sm:$0xff]
        %v248 = vld [vmem:[%s200 + $0x30] sm:$0xff]
        %v249 = vld [vmem:[%s200 + $0x38] sm:$0xff]
        %v250 = vld [vmem:[%s209] sm:$0xf]
        %v252 = vlaneseq
        %v253 = vshrl.u32 %v252, 7
        %v254 = vsub.s32 0, %v253
        %v255 = vrot.slane %v250, %v254
        %v256 = vlaneseq
        %v257 = vshrl.u32 %v256, 7
        %v258 = vsub.s32 1, %v257
        %v259 = vrot.slane %v250, %v258
        %v260 = vlaneseq
        %v261 = vshrl.u32 %v260, 7
        %v262 = vsub.s32 2, %v261
        %v263 = vrot.slane %v250, %v262
        %v264 = vlaneseq
        %v265 = vshrl.u32 %v264, 7
        %v266 = vsub.s32 3, %v265
        %v267 = vrot.slane %v250, %v266
        %v280 = vunpack.c.l.b16 %v242
        %v281 = vunpack.c.h.b16 %v242
        %v282 = vunpack.c.l.b16 %v243
        %v283 = vunpack.c.h.b16 %v243
        %v284 = vunpack.c.l.b16 %v244
        %v285 = vunpack.c.h.b16 %v244
        %v286 = vunpack.c.l.b16 %v245
        %v287 = vunpack.c.h.b16 %v245
        %v288 = vunpack.c.l.b16 %v246
        %v289 = vunpack.c.h.b16 %v246
        %v290 = vunpack.c.l.b16 %v247
        %v291 = vunpack.c.h.b16 %v247
        %v292 = vunpack.c.l.b16 %v248
        %v293 = vunpack.c.h.b16 %v248
        %v294 = vunpack.c.l.b16 %v249
        %v295 = vunpack.c.h.b16 %v249
        %v296 = vpack.c.b16 %v284, %v280
        %v297 = vpack.c.b16 %v285, %v281
        %v298 = vpack.c.b16 %v286, %v282
        %v299 = vpack.c.b16 %v287, %v283
        %v300 = vpack.c.b16 %v292, %v288
        %v301 = vpack.c.b16 %v293, %v289
        %v302 = vpack.c.b16 %v294, %v290
        %v303 = vpack.c.b16 %v295, %v291
        %vm312 = vcmask 261120
        %v314 = vsel %vm312, %v241, 0
        %316 = vmatprep.subr.bf16.mxu0 %v297
        %317 = vmatpush1.bf16.msra.mxu0 %v296
        %318 = vmatprep.subr.bf16.mxu0 %v301
        %319 = vmatpush1.bf16.msra.mxu0 %v300
        %320 = vmatprep.subr.bf16.mxu0 0
        %321 = vmatpush1.bf16.msra.mxu0 0
        %322 = vmatprep.subr.bf16.mxu0 0
        %323 = vmatpush1.bf16.msra.mxu0 0
        %324 = vmatprep.subr.bf16.mxu0 0
        %325 = vmatpush1.bf16.msra.mxu0 0
        %326 = vmatprep.subr.bf16.mxu0 0
        %327 = vmatpush1.bf16.msra.mxu0 0
        %328 = vmatprep.subr.bf16.mxu0 0
        %329 = vmatpush1.bf16.msra.mxu0 0
        %330 = vmatprep.subr.bf16.mxu0 0
        %331 = vmatpush1.bf16.msra.mxu0 0
        %332 = vmatprep.subr.bf16.mxu0 0
        %333 = vmatpush1.bf16.msra.mxu0 0
        %334 = vmatprep.subr.bf16.mxu0 0
        %335 = vmatpush1.bf16.msra.mxu0 0
        %336 = vmatprep.subr.bf16.mxu0 0
        %337 = vmatpush1.bf16.msra.mxu0 0
        %338 = vmatprep.subr.bf16.mxu0 0
        %339 = vmatpush1.bf16.msra.mxu0 0
        %340 = vmatprep.subr.bf16.mxu0 0
        %341 = vmatpush1.bf16.msra.mxu0 0
        %342 = vmatprep.subr.bf16.mxu0 0
        %343 = vmatpush1.bf16.msra.mxu0 0
        %344 = vmatprep.subr.bf16.mxu0 0
        %345 = vmatpush1.bf16.msra.mxu0 0
        %346 = vmatprep.subr.bf16.mxu0 0
        %347 = vmatpush1.bf16.msra.mxu0 0
        %348 = vmatprep.mubr.bf16.mxu0 0
        %349 = vmatmul.mubr.bf16.gmra.mrb[0].mxu0 %v314
        %v350 = vpop.f32.mrb[0].mxu0
        %v351 = vadd.f32 %v255, %v350
        %v352 = vpop.f32.mrb[0].mxu0
        %v353 = vadd.f32 %v259, %v352
        %v354 = vpop.f32.mrb[0].mxu0
        %v355 = vpop.f32.mrb[0].mxu0
        %356 = vdwg.mxu0
        %357 = vmatprep.subr.bf16.mxu0 %v299
        %358 = vmatpush1.bf16.msra.mxu0 %v298
        %359 = vmatprep.subr.bf16.mxu0 %v303
        %360 = vmatpush1.bf16.msra.mxu0 %v302
        %361 = vmatprep.subr.bf16.mxu0 0
        %362 = vmatpush1.bf16.msra.mxu0 0
        %363 = vmatprep.subr.bf16.mxu0 0
        %364 = vmatpush1.bf16.msra.mxu0 0
        %365 = vmatprep.subr.bf16.mxu0 0
        %366 = vmatpush1.bf16.msra.mxu0 0
        %367 = vmatprep.subr.bf16.mxu0 0
        %368 = vmatpush1.bf16.msra.mxu0 0
        %369 = vmatprep.subr.bf16.mxu0 0
        %370 = vmatpush1.bf16.msra.mxu0 0
        %371 = vmatprep.subr.bf16.mxu0 0
        %372 = vmatpush1.bf16.msra.mxu0 0
        %373 = vmatprep.subr.bf16.mxu0 0
        %374 = vmatpush1.bf16.msra.mxu0 0
        %375 = vmatprep.subr.bf16.mxu0 0
        %376 = vmatpush1.bf16.msra.mxu0 0
        %377 = vmatprep.subr.bf16.mxu0 0
        %378 = vmatpush1.bf16.msra.mxu0 0
        %379 = vmatprep.subr.bf16.mxu0 0
        %380 = vmatpush1.bf16.msra.mxu0 0
        %381 = vmatprep.subr.bf16.mxu0 0
        %382 = vmatpush1.bf16.msra.mxu0 0
        %383 = vmatprep.subr.bf16.mxu0 0
        %384 = vmatpush1.bf16.msra.mxu0 0
        %385 = vmatprep.subr.bf16.mxu0 0
        %386 = vmatpush1.bf16.msra.mxu0 0
        %387 = vmatprep.subr.bf16.mxu0 0
        %388 = vmatpush1.bf16.msra.mxu0 0
        %389 = vmatprep.mubr.bf16.mxu0 0
        %390 = vmatmul.mubr.bf16.gmra.mrb[0].mxu0 %v314
        %v391 = vpop.f32.mrb[0].mxu0
        %v392 = vadd.f32 %v263, %v391
        %v393 = vpop.f32.mrb[0].mxu0
        %v394 = vadd.f32 %v267, %v393
        %v395 = vpop.f32.mrb[0].mxu0
        %v396 = vpop.f32.mrb[0].mxu0
        %397 = vdwg.mxu0
        %398 = vst [vmem:[%s236] sm:$0xff] %v351
        %399 = vst [vmem:[%s236 + $0x8] sm:$0xff] %v353
        %400 = vst [vmem:[%s236 + $0x10] sm:$0xff] %v392
        %401 = vst [vmem:[%s236 + $0x18] sm:$0xff] %v394
        %s402 = sand.u32 %s102, 1
        %s403 = scalar_lea.sflag [#allocation4], %s402
        %s404 = sand.u32 %s102, 1
        %s405 = smul.addr %s404, 32
        %s406 = scalar_lea.vmem [#allocation8], %s405
        // Predicated region
        $region45: #{tpu_custom_call.1} parent=31 // pred_check
          %p407 = pneg %p112
        $region46: #{tpu_custom_call.1} parent=31 // pred_check_branch
          %409 = sbr.rel (%p407) target = $region48
        $region47: #{tpu_custom_call.1} parent=31 // pred_region
          %s410 = smul.u32 4, %s21
          %s412 = ssub.s32 512, 512
          %413 = vsyncadd %s403, %s412
          %s414 = smul.addr %s410, 128
          %s415 = scalar_lea.hbm %s3, %s414
          %s417 = sshll.u32 %s406, 4
          %s418 = int_to_ptr.vmem [resolvable:$true] %s417
          %420 = dma.vmem_to_hbm [thread:$0]  %s418, 512, %s415, %s403
        $region48: #{tpu_custom_call.1} parent=31 // pred_fallthru
          _
      $region32: #{tpu_custom_call.1} parent=5 // pred_fallthru
        _
      %p421 = scmp.le.s32.totalorder 2, %s16
      // Predicated region
      $region49: #{tpu_custom_call.1} parent=5 // pred_check
        %p422 = pneg %p421
      $region50: #{tpu_custom_call.1} parent=5 // pred_check_branch
        %424 = sbr.rel (%p422) target = $region52
      $region51: #{tpu_custom_call.1} parent=5 // pred_region
        %s425 = ssub.s32 %s16, 2
        // Predicated region
        $region53: #{tpu_custom_call.1} parent=51 // pred_check
          %p426 = pneg %p118
        $region54: #{tpu_custom_call.1} parent=51 // pred_check_branch
          %428 = sbr.rel (%p426) target = $region56
        $region55: #{tpu_custom_call.1} parent=51 // pred_region
          %s429 = sand.u32 %s103, 1
          %s430 = scalar_lea.sflag [#allocation4], %s429
          %s431 = sand.u32 %s103, 1
          %s432 = smul.addr %s431, 32
          %s433 = scalar_lea.vmem [#allocation8], %s432
          %434 = dma.done %s430, 512
        $region56: #{tpu_custom_call.1} parent=51 // pred_fallthru
          _
      $region52: #{tpu_custom_call.1} parent=5 // pred_fallthru
        _
    $region6: #{tpu_custom_call.1} parent=1 // loop_footer
      %s20 = sadd.s32 1, %s16
    $region7: #{tpu_custom_call.1} parent=1 // loop_footer_branch
      %15 = sbr.rel target = $region3
    $region8: #{tpu_custom_call.1} parent=1 // loop_exit
      _
    %435 = vsyncpa [#allocation3], 1
    %s436 = scalar_lea.sflag [#allocation3], 1
    %437 = vsyncpa %s436, 1
    %438 = vsyncpa [#allocation6], 1
    %s439 = scalar_lea.sflag [#allocation6], 1
    %440 = vsyncpa %s439, 1
    %441 = vsyncpa [#allocation4], 1
    %s442 = scalar_lea.sflag [#allocation4], 1
    %443 = vsyncpa %s442, 1

</llo_original>
